<compile_context>
chip_gen: v5e
topology: v5e:2x2
jax: 0.10.0
libtpu: 0.0.40
codegen_flags: <defaults>
</compile_context>

<pallas_src>
import jax
import jax.numpy as jnp
from jax.experimental import pallas as pl
from jax.experimental.pallas import tpu as pltpu

NEG_SLOPE = 0.01  # nn.LeakyReLU() default negative_slope


def _leaky_relu(x):
    return jnp.where(x > 0, x, NEG_SLOPE * x)


def _round_up(n, m):
    return ((n + m - 1) // m) * m


def encoder_kernel(obs_ref, act_ref, wo_ref, wa_ref, b_ref, o_ref):
    # Fused concat + Linear: obs @ W_obs + act @ W_act + b, then LeakyReLU.
    h = jnp.dot(obs_ref[...], wo_ref[...], preferred_element_type=jnp.float32)
    h = h + jnp.dot(act_ref[...], wa_ref[...], preferred_element_type=jnp.float32)
    h = h + b_ref[...]          # bias loaded once per grid step, broadcast over rows
    o_ref[...] = _leaky_relu(h).astype(o_ref.dtype)


def states_actions_encoder_forward(observation, action, params, *, max_tile_b=512):
    """observation: (..., state_dim), action: (..., action_dim) -> (..., output_size)."""
    w_obs, w_act, b = params
    ds = observation.shape[-1]
    da = action.shape[-1]
    dout = w_obs.shape[-1]
    lead = observation.shape[:-1]
    assert action.shape[:-1] == lead, (observation.shape, action.shape)

    b_flat = 1
    for d in lead:
        b_flat *= d
    obs2d = observation.reshape(b_flat, ds).astype(jnp.float32)
    act2d = action.reshape(b_flat, da).astype(jnp.float32)

    # Batch tile: multiple of 8 sublanes, capped so double-buffered tiles stay
    # tiny relative to VMEM even on v7x; pad B up to a tile multiple.
    tb = min(max_tile_b, _round_up(b_flat, 8))
    b_pad = _round_up(b_flat, tb)
    if b_pad != b_flat:
        obs2d = jnp.pad(obs2d, ((0, b_pad - b_flat), (0, 0)))
        act2d = jnp.pad(act2d, ((0, b_pad - b_flat), (0, 0)))

    grid = (b_pad // tb,)
    cost = pl.CostEstimate(
        flops=2 * b_pad * (ds + da) * dout,
        transcendentals=0,
        bytes_accessed=4 * (b_pad * (ds + da + dout) + (ds + da) * dout + dout),
    )

    out2d = pl.pallas_call(
        encoder_kernel,
        out_shape=jax.ShapeDtypeStruct((b_pad, dout), jnp.float32),
        grid=grid,
        in_specs=[
            pl.BlockSpec((tb, ds), lambda i: (i, 0)),   # obs tile: streams
            pl.BlockSpec((tb, da), lambda i: (i, 0)),   # act tile: streams
            pl.BlockSpec((ds, dout), lambda i: (0, 0)),  # W_obs: resident
            pl.BlockSpec((da, dout), lambda i: (0, 0)),  # W_act: resident
            pl.BlockSpec((1, dout), lambda i: (0, 0)),   # bias: resident
        ],
        out_specs=pl.BlockSpec((tb, dout), lambda i: (i, 0)),
        compiler_params=pltpu.CompilerParams(
            dimension_semantics=("parallel",),   # megacore split on v7x
            vmem_limit_bytes=32 << 20,
        ),
        cost_estimate=cost,
    )(obs2d, act2d, w_obs, w_act, b)

    return out2d[:b_flat].reshape(*lead, dout)


def init_params(key, state_dim, action_dim, output_size):
    """Matches nn.Linear(state_dim+action_dim, output_size) with
    init.kaiming_normal_ on the weight (gain=sqrt(2), std=gain/sqrt(fan_in))
    and PyTorch's default uniform bias init. Weight stored (in, out) and split
    into (state_dim, out) / (action_dim, out) halves for the fused concat."""
    kw, kb = jax.random.split(key)
    fan_in = state_dim + action_dim
    std = jnp.sqrt(2.0 / fan_in)
    w = jax.random.normal(kw, (fan_in, output_size), jnp.float32) * std
    bound = 1.0 / jnp.sqrt(fan_in)
    bias = jax.random.uniform(kb, (1, output_size), jnp.float32, -bound, bound)
    return (w[:state_dim], w[state_dim:], bias)


def reference_forward(observation, action, params):
    """Plain-JAX reference mirroring the PyTorch module."""
    w_obs, w_act, bias = params
    x = jnp.concatenate([observation, action], axis=-1)
    w = jnp.concatenate([w_obs, w_act], axis=0)
    return _leaky_relu(x @ w + bias)


if __name__ == "__main__":
    # (S, E, A, A-1, H) observation and (S, E, A, A-1, action_dim) action
    S, E, A = 2, 2, 3
    state_dim, action_dim, output_size = 16, 8, 32

    key = jax.random.PRNGKey(0)
    k_obs, k_act, k_p = jax.random.split(key, 3)
    obs = jax.random.normal(k_obs, (S, E, A, A - 1, state_dim), jnp.float32)
    act = jax.random.normal(k_act, (S, E, A, A - 1, action_dim), jnp.float32)
    params = init_params(k_p, state_dim, action_dim, output_size)

    out = states_actions_encoder_forward(obs, act, params)
    out = jax.block_until_ready(out)

    ref = reference_forward(obs, act, params)
    assert out.shape == (S, E, A, A - 1, output_size), out.shape
    assert jnp.allclose(out, ref, atol=1e-5, rtol=1e-5), float(jnp.max(jnp.abs(out - ref)))

    print("KERNEL_OK")
</pallas_src>

<mosaic_0001>
module attributes {stable_mosaic.version = 11 : i64} {
  func.func @encoder_kernel(%arg0: i32, %arg1: memref<24x16xf32, #tpu.memory_space<vmem>>, %arg2: memref<24x8xf32, #tpu.memory_space<vmem>>, %arg3: memref<16x32xf32, #tpu.memory_space<vmem>>, %arg4: memref<8x32xf32, #tpu.memory_space<vmem>>, %arg5: memref<1x32xf32, #tpu.memory_space<vmem>>, %arg6: memref<24x32xf32, #tpu.memory_space<vmem>>) attributes {dimension_semantics = [#tpu.dimension_semantics<parallel>], iteration_bounds = array<i64: 1>, scalar_prefetch = 0 : i64, scratch_operands = 0 : i64, tpu.core_type = #tpu.core_type<tc>, window_params = [{transform_indices = @transform_0, window_bounds = array<i64: 24, 16>}, {transform_indices = @transform_1, window_bounds = array<i64: 24, 8>}, {pipeline_mode = #tpu.pipeline_mode<synchronous>, transform_indices = @transform_2, window_bounds = array<i64: 16, 32>}, {pipeline_mode = #tpu.pipeline_mode<synchronous>, transform_indices = @transform_3, window_bounds = array<i64: 8, 32>}, {pipeline_mode = #tpu.pipeline_mode<synchronous>, transform_indices = @transform_4, window_bounds = array<i64: 1, 32>}, {transform_indices = @transform_5, window_bounds = array<i64: 24, 32>}]} {
    %c0 = arith.constant 0 : index
    %c0_0 = arith.constant 0 : index
    %0 = vector.load %arg1[%c0, %c0_0] : memref<24x16xf32, #tpu.memory_space<vmem>>, vector<24x16xf32>
    %c0_1 = arith.constant 0 : index
    %c0_2 = arith.constant 0 : index
    %1 = vector.load %arg3[%c0_1, %c0_2] : memref<16x32xf32, #tpu.memory_space<vmem>>, vector<16x32xf32>
    %cst = arith.constant dense<0.000000e+00> : vector<24x32xf32>
    %2 = tpu.matmul %0, %1, %cst {dimension_numbers = #tpu.dot_dimension_numbers<[1], [0], [0], [1], [0, 0, 1, 1], [], []>} : vector<24x16xf32>, vector<16x32xf32>, vector<24x32xf32> -> vector<24x32xf32>
    %c0_3 = arith.constant 0 : index
    %c0_4 = arith.constant 0 : index
    %3 = vector.load %arg2[%c0_3, %c0_4] : memref<24x8xf32, #tpu.memory_space<vmem>>, vector<24x8xf32>
    %c0_5 = arith.constant 0 : index
    %c0_6 = arith.constant 0 : index
    %4 = vector.load %arg4[%c0_5, %c0_6] : memref<8x32xf32, #tpu.memory_space<vmem>>, vector<8x32xf32>
    %cst_7 = arith.constant dense<0.000000e+00> : vector<24x32xf32>
    %5 = tpu.matmul %3, %4, %cst_7 {dimension_numbers = #tpu.dot_dimension_numbers<[1], [0], [0], [1], [0, 0, 1, 1], [], []>} : vector<24x8xf32>, vector<8x32xf32>, vector<24x32xf32> -> vector<24x32xf32>
    %6 = arith.addf %2, %5 : vector<24x32xf32>
    %c0_8 = arith.constant 0 : index
    %c0_9 = arith.constant 0 : index
    %7 = vector.load %arg5[%c0_8, %c0_9] : memref<1x32xf32, #tpu.memory_space<vmem>>, vector<1x32xf32>
    %8 = vector.broadcast %7 : vector<1x32xf32> to vector<24x32xf32>
    %9 = arith.addf %6, %8 : vector<24x32xf32>
    %cst_10 = arith.constant 0.000000e+00 : f32
    %10 = vector.broadcast %cst_10 : f32 to vector<24x32xf32>
    %11 = arith.cmpf ogt, %9, %10 : vector<24x32xf32>
    %cst_11 = arith.constant 0.00999999977 : f32
    %12 = vector.broadcast %cst_11 : f32 to vector<24x32xf32>
    %13 = arith.mulf %12, %9 : vector<24x32xf32>
    %14 = arith.select %11, %9, %13 : vector<24x32xi1>, vector<24x32xf32>
    %c0_12 = arith.constant 0 : index
    %c0_13 = arith.constant 0 : index
    %15 = vector.load %arg6[%c0_12, %c0_13] : memref<24x32xf32, #tpu.memory_space<vmem>>, vector<24x32xf32>
    tpu.vector_store %arg6[%c0_12, %c0_13], %14 {strides = array<i32>} : memref<24x32xf32, #tpu.memory_space<vmem>>, vector<24x32xf32>,
    return
  }
  func.func @transform_0(%arg0: i32) -> (i32, i32) {
    %c0_i32 = arith.constant 0 : i32
    %c0_i32_0 = arith.constant 0 : i32
    return %arg0, %c0_i32 : i32, i32
  }
  func.func @transform_1(%arg0: i32) -> (i32, i32) {
    %c0_i32 = arith.constant 0 : i32
    %c0_i32_0 = arith.constant 0 : i32
    return %arg0, %c0_i32 : i32, i32
  }
  func.func @transform_2(%arg0: i32) -> (i32, i32) {
    %c0_i32 = arith.constant 0 : i32
    %c0_i32_0 = arith.constant 0 : i32
    %c0_i32_1 = arith.constant 0 : i32
    return %c0_i32, %c0_i32_0 : i32, i32
  }
  func.func @transform_3(%arg0: i32) -> (i32, i32) {
    %c0_i32 = arith.constant 0 : i32
    %c0_i32_0 = arith.constant 0 : i32
    %c0_i32_1 = arith.constant 0 : i32
    return %c0_i32, %c0_i32_0 : i32, i32
  }
  func.func @transform_4(%arg0: i32) -> (i32, i32) {
    %c0_i32 = arith.constant 0 : i32
    %c0_i32_0 = arith.constant 0 : i32
    %c0_i32_1 = arith.constant 0 : i32
    return %c0_i32, %c0_i32_0 : i32, i32
  }
  func.func @transform_5(%arg0: i32) -> (i32, i32) {
    %c0_i32 = arith.constant 0 : i32
    %c0_i32_0 = arith.constant 0 : i32
    return %arg0, %c0_i32 : i32, i32
  }
}

</mosaic_0001>

<llo_original>
// kernel: tpu_custom_call.1
$region0: #{tpu_custom_call.1}
  #allocation0 [shape = 'u32[]', space=smem, size = 0x4, offset = 0x4, fixed_abs, tag = 'smem constant byte address 0x4 - core index']
  #allocation1 [shape = 'u32[72,128]{1,0:T(1,128)}', space=vmem, size = 0x9000, scoped, tag = 'internal scratch']
  %s0 = inlined_call_operand.vmem [shape: f32[24,16], index: 0, kind: input, shape index: {}]
  %s1 = inlined_call_operand.vmem [shape: f32[24,8], index: 1, kind: input, shape index: {}]
  %s2 = inlined_call_operand.vmem [shape: f32[16,32], index: 2, kind: input, shape index: {}]
  %s3 = inlined_call_operand.vmem [shape: f32[8,32], index: 3, kind: input, shape index: {}]
  %s4 = inlined_call_operand.vmem [shape: f32[1,32], index: 4, kind: input, shape index: {}]
  %s5 = inlined_call_operand.hbm [shape: f32[24,32], index: 5, kind: output, shape index: {}]
  %s6 = sld [smem:[#allocation0]]
  $region30: #{tpu_custom_call.1} parent=0
    _
  %s8 = ssub.s32 1, %s6
  %s9 = scalar_select 0, %s8, %s6
  $region1: #{tpu_custom_call.1} parent=0
    #allocation2 [shape = 'u8[12288]{0}', space=vmem, size = 0x3000, scoped, tag = 'output window, operand 0, single buffered']
    #allocation3 [shape = 's32[1]{0}', space=sflag, size = 0x4, scoped, tag = 'scoped memory for tpu_custom_call.1']
    %10 = vsyncpa [#allocation3], 0
    // Predicated region
    $region2: #{tpu_custom_call.1} parent=1 // pred_check
      _
    $region3: #{tpu_custom_call.1} parent=1 // pred_check_branch
      %12 = sbr.rel (0) target = $region5
    $region4: #{tpu_custom_call.1} parent=1 // pred_region
      _
    $region5: #{tpu_custom_call.1} parent=1 // pred_fallthru
      _
    // Predicated region
    $region6: #{tpu_custom_call.1} parent=1 // pred_check
      _
    $region7: #{tpu_custom_call.1} parent=1 // pred_check_branch
      %14 = sbr.rel (0) target = $region9
    $region8: #{tpu_custom_call.1} parent=1 // pred_region
      _
    $region9: #{tpu_custom_call.1} parent=1 // pred_fallthru
      _
    // Predicated region
    $region10: #{tpu_custom_call.1} parent=1 // pred_check
      _
    $region11: #{tpu_custom_call.1} parent=1 // pred_check_branch
      %16 = sbr.rel (0) target = $region13
    $region12: #{tpu_custom_call.1} parent=1 // pred_region
      _
    $region13: #{tpu_custom_call.1} parent=1 // pred_fallthru
      _
    // Predicated region
    $region14: #{tpu_custom_call.1} parent=1 // pred_check
      _
    $region15: #{tpu_custom_call.1} parent=1 // pred_check_branch
      %18 = sbr.rel (0) target = $region17
    $region16: #{tpu_custom_call.1} parent=1 // pred_region
      _
    $region17: #{tpu_custom_call.1} parent=1 // pred_fallthru
      _
    // Predicated region
    $region18: #{tpu_custom_call.1} parent=1 // pred_check
      _
    $region19: #{tpu_custom_call.1} parent=1 // pred_check_branch
      %20 = sbr.rel (0) target = $region21
    $region20: #{tpu_custom_call.1} parent=1 // pred_region
      _
    $region21: #{tpu_custom_call.1} parent=1 // pred_fallthru
      _
    %v21 = vld [vmem:[%s0] sm:$0xff]
    %v22 = vld [vmem:[%s0 + $0x8] sm:$0xff]
    %v23 = vld [vmem:[%s0 + $0x10] sm:$0xff]
    %v24 = vld [vmem:[%s2] sm:$0xff]
    %v25 = vld [vmem:[%s2 + $0x8] sm:$0xff]
    %v26 = vld [vmem:[%s1] sm:$0xff]
    %v27 = vld [vmem:[%s1 + $0x8] sm:$0xff]
    %v28 = vld [vmem:[%s1 + $0x10] sm:$0xff]
    %v29 = vld [vmem:[%s3] sm:$0xff]
    %vm30 = vcmask 64512
    %v32 = vsel %vm30, %v26, 0
    %v35 = vsel %vm30, %v27, 0
    %v38 = vsel %vm30, %v28, 0
    %40 = vmatpush.msra.mxu0 0.0
    %41 = vmatpush.msra.mxu0 0.0
    %42 = vmatpush.msra.mxu0 0.0
    %43 = vmatpush.msra.mxu0 0.0
    %44 = vmatpush.msra.mxu0 0.0
    %45 = vmatpush.msra.mxu0 0.0
    %46 = vmatpush.msra.mxu0 0.0
    %47 = vmatpush.msra.mxu0 0.0
    %48 = vmatpush.msra.mxu0 0.0
    %49 = vmatpush.msra.mxu0 0.0
    %50 = vmatpush.msra.mxu0 0.0
    %51 = vmatpush.msra.mxu0 0.0
    %52 = vmatpush.msra.mxu0 0.0
    %53 = vmatpush.msra.mxu0 0.0
    %54 = vmatpush.msra.mxu0 0.0
    %55 = vmatpush.msra.mxu0 %v29
    %56 = vmatmul.f32.gmra.mxu0 %v32
    %v57 = vpop.f32.mrf.mxu0
    %v58 = vadd.f32 0.0, %v57
    %59 = vmatmul.f32.gmra.mxu0 %v35
    %v60 = vpop.f32.mrf.mxu0
    %v61 = vadd.f32 0.0, %v60
    %62 = vmatmul.f32.gmra.mxu0 %v38
    %v63 = vpop.f32.mrf.mxu0
    %v64 = vadd.f32 0.0, %v63
    %65 = vdwg.mxu0
    %vm66 = vcmask 130048
    %v68 = vsel %vm66, %v21, 0
    %v71 = vsel %vm66, %v22, 0
    %v74 = vsel %vm66, %v23, 0
    %76 = vmatpush.msra.mxu0 0.0
    %77 = vmatpush.msra.mxu0 0.0
    %78 = vmatpush.msra.mxu0 0.0
    %79 = vmatpush.msra.mxu0 0.0
    %80 = vmatpush.msra.mxu0 0.0
    %81 = vmatpush.msra.mxu0 0.0
    %82 = vmatpush.msra.mxu0 0.0
    %83 = vmatpush.msra.mxu0 0.0
    %84 = vmatpush.msra.mxu0 0.0
    %85 = vmatpush.msra.mxu0 0.0
    %86 = vmatpush.msra.mxu0 0.0
    %87 = vmatpush.msra.mxu0 0.0
    %88 = vmatpush.msra.mxu0 0.0
    %89 = vmatpush.msra.mxu0 0.0
    %90 = vmatpush.msra.mxu0 %v25
    %91 = vmatpush.msra.mxu0 %v24
    %92 = vmatmul.f32.gmra.mxu0 %v68
    %v93 = vpop.f32.mrf.mxu0
    %v94 = vadd.f32 %v58, %v93
    %95 = vmatmul.f32.gmra.mxu0 %v71
    %v96 = vpop.f32.mrf.mxu0
    %v97 = vadd.f32 %v61, %v96
    %98 = vmatmul.f32.gmra.mxu0 %v74
    %v99 = vpop.f32.mrf.mxu0
    %v100 = vadd.f32 %v64, %v99
    %101 = vdwg.mxu0
    %v102 = vld [vmem:[%s4] sm:$0x1]
    %v104 = vperm.slane %v102, 0
    %v106 = vadd.f32 %v94, %v104
    %v107 = vadd.f32 %v97, %v104
    %v108 = vadd.f32 %v100, %v104
    %vm109 = vcmp.gt.f32.partialorder %v106, 0.0
    %vm110 = vcmp.gt.f32.partialorder %v107, 0.0
    %vm111 = vcmp.gt.f32.partialorder %v108, 0.0
    %v112 = vmul.f32 %v106, 0.01
    %v113 = vmul.f32 %v107, 0.01
    %v114 = vmul.f32 %v108, 0.01
    %v115 = vsel %vm109, %v106, %v112
    %v116 = vsel %vm110, %v107, %v113
    %v117 = vsel %vm111, %v108, %v114
    %vm118 = vcmask 261120
    %119 = vst.msk [vmem:[#allocation2] sm:$0xff] %vm118, %v115
    %120 = vst.msk [vmem:[#allocation2 + $0x8] sm:$0xff] %vm118, %v116
    %121 = vst.msk [vmem:[#allocation2 + $0x10] sm:$0xff] %vm118, %v117
    // Predicated region
    $region22: #{tpu_custom_call.1} parent=1 // pred_check
      _
    $region23: #{tpu_custom_call.1} parent=1 // pred_check_branch
      %123 = sbr.rel (0) target = $region25
    $region24: #{tpu_custom_call.1} parent=1 // pred_region
      %125 = vsyncadd [#allocation3], 0
      %s126 = sshll.u32 [#allocation2], 4
      %s127 = int_to_ptr.vmem [resolvable:$true] %s126
      %s128 = sshll.u32 %s5, 4
      %s129 = int_to_ptr.hbm [resolvable:$true] %s128
      %134 = dma.vmem_to_hbm [thread:$0]  %s127, 384, %s129, [#allocation3], 128, 128, 8
    $region25: #{tpu_custom_call.1} parent=1 // pred_fallthru
      _
    // Predicated region
    $region26: #{tpu_custom_call.1} parent=1 // pred_check
      _
    $region27: #{tpu_custom_call.1} parent=1 // pred_check_branch
      %136 = sbr.rel (0) target = $region29
    $region28: #{tpu_custom_call.1} parent=1 // pred_region
      %138 = dma.done [#allocation3], 384
    $region29: #{tpu_custom_call.1} parent=1 // pred_fallthru
      _
    %139 = vsyncpa [#allocation3], 1

</llo_original>
